<compile_context>
chip_gen: v7x
topology: tpu7x:2x2x1
jax: 0.10.0
libtpu: 0.0.40
codegen_flags: <defaults>
</compile_context>

<pallas_src>
import math

import jax
import jax.numpy as jnp
import numpy as np
from jax.experimental import pallas as pl
from jax.experimental.pallas import tpu as pltpu

LOG_2PI = float(math.log(2.0 * math.pi))


def _round_up(v, m):
    return ((v + m - 1) // m) * m


def _pad2(a, rows, cols):
    r, c = a.shape
    return jnp.pad(a, ((0, rows - r), (0, cols - c)))


def _make_kernel(log_w0, log_w1, log_w2, l_pad):
    """Kernel with static log mixture weights / padded latent dim baked in."""
    c_stnd = -0.5 * LOG_2PI + log_w0                 # hoisted constants
    c_unif = -0.5 * (10.0 + LOG_2PI) + log_w2
    half_inv_var_unif = 0.5 * math.exp(-10.0)

    def kernel(x_ref, z_ref, w1_ref, b1_ref, whd_ref, bhd_ref, out_ref, h_acc):
        k = pl.program_id(1)

        # --- accumulate h = x @ W1 over the D_in reduction axis ---
        @pl.when(k == 0)
        def _():
            h_acc[...] = jnp.zeros_like(h_acc)

        h_acc[...] += jnp.dot(x_ref[...], w1_ref[...],
                              preferred_element_type=jnp.float32)

        # --- finalize: swish, fused mu/logvar heads, mixture log-density ---
        @pl.when(k == pl.num_programs(1) - 1)
        def _():
            h = h_acc[...] + b1_ref[...]
            h = h * jax.nn.sigmoid(h)                              # swish
            heads = jnp.dot(h.astype(whd_ref.dtype), whd_ref[...],
                            preferred_element_type=jnp.float32) + bhd_ref[...]
            post_mu = heads[:, :l_pad]
            post_logvar = heads[:, l_pad:]

            z = z_ref[...]
            z2 = z * z
            # standard prior: mu=0, logvar=0
            stnd = c_stnd - 0.5 * z2
            # posterior prior: mu=post_mu, logvar=post_logvar
            diff = z - post_mu
            post = -0.5 * (post_logvar + LOG_2PI
                           + diff * diff * jnp.exp(-post_logvar)) + log_w1
            # uniform-ish prior: mu=0, logvar=10
            unif = c_unif - half_inv_var_unif * z2

            # logsumexp over the 3 components
            m = jnp.maximum(jnp.maximum(stnd, post), unif)
            out = m + jnp.log(jnp.exp(stnd - m) + jnp.exp(post - m)
                              + jnp.exp(unif - m))
            out_ref[...] = out.astype(out_ref.dtype)

    return kernel


def composite_prior_forward(x, z, params, mixture_weights, *, tile_b=None,
                            tile_k=None, use_bf16=True):
    """x: (B, D_in), z: (B, L) -> (B, L) float32 log mixture density."""
    B, D_in = x.shape
    Bz, L = z.shape
    assert Bz == B
    H = params["w1"].shape[1]

    dot_dtype = jnp.bfloat16 if use_bf16 else jnp.float32
    db = 2 if use_bf16 else 4
    row_align = 16 if use_bf16 else 8

    # --- padded, lane-dense shapes ---
    L_pad = _round_up(L, 128)
    H_pad = _round_up(H, 128)
    D_al = _round_up(D_in, 128)

    if tile_k is None:
        tile_k = min(1024, D_al)
    assert tile_k % 128 == 0
    D_pad = _round_up(D_al, tile_k)

    B_al = _round_up(B, row_align)
    if tile_b is None:
        tile_b = min(256, B_al)
        # prefer >= 2 batch tiles so the "parallel" axis can shard across
        # v7x's two TensorCores when the batch allows it.
        if tile_b == B_al and B_al >= 2 * row_align:
            tile_b = _round_up(B_al // 2, row_align)
    assert tile_b % row_align == 0, "tile_b must respect sublane alignment"
    B_pad = _round_up(B_al, tile_b)

    # --- host-side padding, head fusion, dtype prep ---
    x_p = _pad2(x.astype(jnp.float32), B_pad, D_pad).astype(dot_dtype)
    z_p = _pad2(z.astype(jnp.float32), B_pad, L_pad)
    w1_p = _pad2(params["w1"].astype(jnp.float32), D_pad, H_pad).astype(dot_dtype)
    b1_p = _pad2(params["b1"].astype(jnp.float32), 1, H_pad)
    wmu_p = _pad2(params["wmu"].astype(jnp.float32), H_pad, L_pad)
    wlv_p = _pad2(params["wlv"].astype(jnp.float32), H_pad, L_pad)
    w_hd = jnp.concatenate([wmu_p, wlv_p], axis=1).astype(dot_dtype)
    bmu_p = _pad2(params["bmu"].astype(jnp.float32), 1, L_pad)
    blv_p = _pad2(params["blv"].astype(jnp.float32), 1, L_pad)
    b_hd = jnp.concatenate([bmu_p, blv_p], axis=1)

    log_ws = [float(np.log(w)) for w in mixture_weights]
    kernel = _make_kernel(log_ws[0], log_ws[1], log_ws[2], L_pad)

    grid = (B_pad // tile_b, D_pad // tile_k)   # reduction axis last

    in_specs = [
        pl.BlockSpec((tile_b, tile_k), lambda i, k: (i, k)),      # x
        pl.BlockSpec((tile_b, L_pad), lambda i, k: (i, 0)),       # z
        pl.BlockSpec((tile_k, H_pad), lambda i, k: (k, 0)),       # w1
        pl.BlockSpec((1, H_pad), lambda i, k: (0, 0)),            # b1
        pl.BlockSpec((H_pad, 2 * L_pad), lambda i, k: (0, 0)),    # wmu|wlv
        pl.BlockSpec((1, 2 * L_pad), lambda i, k: (0, 0)),        # bmu|blv
    ]
    out_spec = pl.BlockSpec((tile_b, L_pad), lambda i, k: (i, 0))

    # VMEM budget: double-buffered inputs/outputs + f32 h accumulator.
    vmem_bytes = (2 * (tile_b * tile_k * db + tile_b * L_pad * 4
                       + tile_k * H_pad * db + H_pad * 4
                       + H_pad * 2 * L_pad * db + 2 * L_pad * 4
                       + tile_b * L_pad * 4)
                  + tile_b * H_pad * 4)
    vmem_limit = min(128 * 1024 * 1024,
                     max(32 * 1024 * 1024, int(vmem_bytes * 1.5)))

    cost = pl.CostEstimate(
        flops=2 * B_pad * (D_pad * H_pad + H_pad * 2 * L_pad)
        + 12 * B_pad * L_pad,
        transcendentals=B_pad * (H_pad + 5 * L_pad),
        bytes_accessed=(x_p.size * db + z_p.size * 4
                        + w1_p.size * db * grid[0] + b1_p.size * 4
                        + w_hd.size * db + b_hd.size * 4
                        + B_pad * L_pad * 4),
    )

    out_padded = pl.pallas_call(
        kernel,
        out_shape=jax.ShapeDtypeStruct((B_pad, L_pad), jnp.float32),
        grid=grid,
        in_specs=in_specs,
        out_specs=out_spec,
        scratch_shapes=[pltpu.VMEM((tile_b, H_pad), jnp.float32)],
        compiler_params=pltpu.CompilerParams(
            dimension_semantics=("parallel", "arbitrary"),
            vmem_limit_bytes=vmem_limit),
        cost_estimate=cost,
    )(x_p, z_p, w1_p, b1_p, w_hd, b_hd)

    return out_padded[:B, :L]


def composite_prior_reference(x, z, params, mixture_weights):
    """Pure-JAX f32 reference mirroring the PyTorch forward."""
    h = x @ params["w1"] + params["b1"]
    h = h * jax.nn.sigmoid(h)
    post_mu = h @ params["wmu"] + params["bmu"]
    post_logvar = h @ params["wlv"] + params["blv"]

    def log_norm_pdf(zz, mu, logvar):
        return -0.5 * (logvar + LOG_2PI + (zz - mu) ** 2 / jnp.exp(logvar))

    stnd = log_norm_pdf(z, 0.0, jnp.zeros_like(z))
    post = log_norm_pdf(z, post_mu, post_logvar)
    unif = log_norm_pdf(z, 0.0, jnp.full_like(z, 10.0))
    gs = [g + np.log(w) for g, w in zip([stnd, post, unif], mixture_weights)]
    dens = jnp.stack(gs, axis=-1)
    return jax.scipy.special.logsumexp(dens, axis=-1)


if __name__ == "__main__":
    # Small shapes consistent with the module: (hidden_dim, latent_dim, input_dim)
    B, D_in, H, L = 8, 128, 64, 32
    mixture_weights = [3.0 / 20.0, 3.0 / 4.0, 1.0 / 10.0]

    key = jax.random.PRNGKey(0)
    kx, kz, k1, k2, k3 = jax.random.split(key, 5)

    x = jax.random.normal(kx, (B, D_in), dtype=jnp.float32)
    z = jax.random.normal(kz, (B, L), dtype=jnp.float32)

    # Deterministic synthetic encoder_old parameters.
    # TODO(synk): in the original code `encoder_old` is an externally-assigned
    # module; a swish-MLP mu/logvar encoder stands in for forward_for_loss(x, 0).
    params = {
        "w1": 0.05 * jax.random.normal(k1, (D_in, H), dtype=jnp.float32),
        "b1": jnp.zeros((1, H), dtype=jnp.float32),
        "wmu": 0.05 * jax.random.normal(k2, (H, L), dtype=jnp.float32),
        "bmu": jnp.zeros((1, L), dtype=jnp.float32),
        "wlv": 0.05 * jax.random.normal(k3, (H, L), dtype=jnp.float32),
        "blv": jnp.zeros((1, L), dtype=jnp.float32),
    }

    ref = composite_prior_reference(x, z, params, mixture_weights)

    # f32 GEMM path: exact match with the reference.
    out_f32 = composite_prior_forward(x, z, params, mixture_weights,
                                      use_bf16=False)
    out_f32 = jax.block_until_ready(out_f32)
    np.testing.assert_allclose(np.asarray(out_f32), np.asarray(ref),
                               rtol=1e-5, atol=1e-5)

    # bf16 GEMM path (default, v6e/v7x fast path): loose tolerance.
    out_bf16 = composite_prior_forward(x, z, params, mixture_weights)
    out_bf16 = jax.block_until_ready(out_bf16)
    np.testing.assert_allclose(np.asarray(out_bf16), np.asarray(ref),
                               rtol=2e-2, atol=2e-2)

    print("KERNEL_OK")
</pallas_src>

<mosaic_0001>
module attributes {stable_mosaic.version = 11 : i64} {
  func.func @kernel(%arg0: i32, %arg1: i32, %arg2: memref<8x128xf32, #tpu.memory_space<vmem>>, %arg3: memref<8x128xf32, #tpu.memory_space<vmem>>, %arg4: memref<128x128xf32, #tpu.memory_space<vmem>>, %arg5: memref<1x128xf32, #tpu.memory_space<vmem>>, %arg6: memref<128x256xf32, #tpu.memory_space<vmem>>, %arg7: memref<1x256xf32, #tpu.memory_space<vmem>>, %arg8: memref<8x128xf32, #tpu.memory_space<vmem>>, %arg9: memref<8x128xf32, #tpu.memory_space<vmem>>) attributes {dimension_semantics = [#tpu.dimension_semantics<parallel>, #tpu.dimension_semantics<arbitrary>], iteration_bounds = array<i64: 1, 1>, scalar_prefetch = 0 : i64, scratch_operands = 1 : i64, tpu.core_type = #tpu.core_type<tc>, window_params = [{transform_indices = @transform_0, window_bounds = array<i64: 8, 128>}, {transform_indices = @transform_1, window_bounds = array<i64: 8, 128>}, {transform_indices = @transform_2, window_bounds = array<i64: 128, 128>}, {pipeline_mode = #tpu.pipeline_mode<synchronous>, transform_indices = @transform_3, window_bounds = array<i64: 1, 128>}, {pipeline_mode = #tpu.pipeline_mode<synchronous>, transform_indices = @transform_4, window_bounds = array<i64: 128, 256>}, {pipeline_mode = #tpu.pipeline_mode<synchronous>, transform_indices = @transform_5, window_bounds = array<i64: 1, 256>}, {transform_indices = @transform_6, window_bounds = array<i64: 8, 128>}]} {
    %c0_i32 = arith.constant 0 : i32
    %0 = arith.cmpi eq, %arg1, %c0_i32 : i32
    %1 = arith.extui %0 : i1 to i32
    %c0_i32_0 = arith.constant 0 : i32
    %2 = arith.cmpi ne, %1, %c0_i32_0 : i32
    scf.if %2 {
      %cst_10 = arith.constant 0.000000e+00 : f32
      %12 = vector.broadcast %cst_10 : f32 to vector<8x128xf32>
      %c0_11 = arith.constant 0 : index
      %c0_12 = arith.constant 0 : index
      %13 = vector.load %arg9[%c0_11, %c0_12] : memref<8x128xf32, #tpu.memory_space<vmem>>, vector<8x128xf32>
      tpu.vector_store %arg9[%c0_11, %c0_12], %12 {strides = array<i32>} : memref<8x128xf32, #tpu.memory_space<vmem>>, vector<8x128xf32>,
    } else {
    }
    %c0 = arith.constant 0 : index
    %c0_1 = arith.constant 0 : index
    %3 = vector.load %arg9[%c0, %c0_1] : memref<8x128xf32, #tpu.memory_space<vmem>>, vector<8x128xf32>
    %c0_2 = arith.constant 0 : index
    %c0_3 = arith.constant 0 : index
    %4 = vector.load %arg2[%c0_2, %c0_3] : memref<8x128xf32, #tpu.memory_space<vmem>>, vector<8x128xf32>
    %c0_4 = arith.constant 0 : index
    %c0_5 = arith.constant 0 : index
    %5 = vector.load %arg4[%c0_4, %c0_5] : memref<128x128xf32, #tpu.memory_space<vmem>>, vector<128x128xf32>
    %cst = arith.constant dense<0.000000e+00> : vector<8x128xf32>
    %6 = tpu.matmul %4, %5, %cst {dimension_numbers = #tpu.dot_dimension_numbers<[1], [0], [0], [1], [0, 0, 1, 1], [], []>} : vector<8x128xf32>, vector<128x128xf32>, vector<8x128xf32> -> vector<8x128xf32>
    %7 = arith.addf %3, %6 : vector<8x128xf32>
    %c0_6 = arith.constant 0 : index
    %c0_7 = arith.constant 0 : index
    %8 = vector.load %arg9[%c0_6, %c0_7] : memref<8x128xf32, #tpu.memory_space<vmem>>, vector<8x128xf32>
    tpu.vector_store %arg9[%c0_6, %c0_7], %7 {strides = array<i32>} : memref<8x128xf32, #tpu.memory_space<vmem>>, vector<8x128xf32>,
    %c0_i32_8 = arith.constant 0 : i32
    %9 = arith.cmpi eq, %arg1, %c0_i32_8 : i32
    %10 = arith.extui %9 : i1 to i32
    %c0_i32_9 = arith.constant 0 : i32
    %11 = arith.cmpi ne, %10, %c0_i32_9 : i32
    scf.if %11 {
      %c0_10 = arith.constant 0 : index
      %c0_11 = arith.constant 0 : index
      %12 = vector.load %arg9[%c0_10, %c0_11] : memref<8x128xf32, #tpu.memory_space<vmem>>, vector<8x128xf32>
      %c0_12 = arith.constant 0 : index
      %c0_13 = arith.constant 0 : index
      %13 = vector.load %arg5[%c0_12, %c0_13] : memref<1x128xf32, #tpu.memory_space<vmem>>, vector<1x128xf32>
      %14 = vector.broadcast %13 : vector<1x128xf32> to vector<8x128xf32>
      %15 = arith.addf %12, %14 : vector<8x128xf32>
      %16 = arith.negf %15 : vector<8x128xf32>
      %17 = math.exp %16 : vector<8x128xf32>
      %cst_14 = arith.constant 1.000000e+00 : f32
      %18 = vector.broadcast %cst_14 : f32 to vector<8x128xf32>
      %19 = arith.addf %18, %17 : vector<8x128xf32>
      %20 = arith.divf %18, %19 : vector<8x128xf32>
      %21 = arith.mulf %15, %20 : vector<8x128xf32>
      %c0_15 = arith.constant 0 : index
      %c0_16 = arith.constant 0 : index
      %22 = vector.load %arg6[%c0_15, %c0_16] : memref<128x256xf32, #tpu.memory_space<vmem>>, vector<128x256xf32>
      %cst_17 = arith.constant dense<0.000000e+00> : vector<8x256xf32>
      %23 = tpu.matmul %21, %22, %cst_17 {dimension_numbers = #tpu.dot_dimension_numbers<[1], [0], [0], [1], [0, 0, 1, 1], [], []>} : vector<8x128xf32>, vector<128x256xf32>, vector<8x256xf32> -> vector<8x256xf32>
      %c0_18 = arith.constant 0 : index
      %c0_19 = arith.constant 0 : index
      %24 = vector.load %arg7[%c0_18, %c0_19] : memref<1x256xf32, #tpu.memory_space<vmem>>, vector<1x256xf32>
      %25 = vector.broadcast %24 : vector<1x256xf32> to vector<8x256xf32>
      %26 = arith.addf %23, %25 : vector<8x256xf32>
      %27 = vector.extract_strided_slice %26 {offsets = [0, 0], sizes = [8, 128], strides = [1, 1]} : vector<8x256xf32> to vector<8x128xf32>
      %28 = vector.extract_strided_slice %26 {offsets = [0, 128], sizes = [8, 128], strides = [1, 1]} : vector<8x256xf32> to vector<8x128xf32>
      %c0_20 = arith.constant 0 : index
      %c0_21 = arith.constant 0 : index
      %29 = vector.load %arg3[%c0_20, %c0_21] : memref<8x128xf32, #tpu.memory_space<vmem>>, vector<8x128xf32>
      %30 = arith.mulf %29, %29 : vector<8x128xf32>
      %cst_22 = arith.constant 5.000000e-01 : f32
      %31 = vector.broadcast %cst_22 : f32 to vector<8x128xf32>
      %32 = arith.mulf %31, %30 : vector<8x128xf32>
      %cst_23 = arith.constant -2.81605864 : f32
      %33 = vector.broadcast %cst_23 : f32 to vector<8x128xf32>
      %34 = arith.subf %33, %32 : vector<8x128xf32>
      %35 = arith.subf %29, %27 : vector<8x128xf32>
      %cst_24 = arith.constant 1.83787704 : f32
      %36 = vector.broadcast %cst_24 : f32 to vector<8x128xf32>
      %37 = arith.addf %28, %36 : vector<8x128xf32>
      %38 = arith.mulf %35, %35 : vector<8x128xf32>
      %cst_25 = arith.constant 0.000000e+00 : f32
      %39 = vector.broadcast %cst_25 : f32 to vector<8x128xf32>
      %40 = arith.subf %39, %28 : vector<8x128xf32>
      %41 = math.exp %40 : vector<8x128xf32>
      %42 = arith.mulf %38, %41 : vector<8x128xf32>
      %43 = arith.addf %37, %42 : vector<8x128xf32>
      %cst_26 = arith.constant -5.000000e-01 : f32
      %44 = vector.broadcast %cst_26 : f32 to vector<8x128xf32>
      %45 = arith.mulf %44, %43 : vector<8x128xf32>
      %cst_27 = arith.constant -0.287682086 : f32
      %46 = vector.broadcast %cst_27 : f32 to vector<8x128xf32>
      %47 = arith.addf %45, %46 : vector<8x128xf32>
      %cst_28 = arith.constant 2.26999655E-5 : f32
      %48 = vector.broadcast %cst_28 : f32 to vector<8x128xf32>
      %49 = arith.mulf %48, %30 : vector<8x128xf32>
      %cst_29 = arith.constant -8.22152328 : f32
      %50 = vector.broadcast %cst_29 : f32 to vector<8x128xf32>
      %51 = arith.subf %50, %49 : vector<8x128xf32>
      %52 = arith.maximumf %34, %47 : vector<8x128xf32>
      %53 = arith.maximumf %52, %51 : vector<8x128xf32>
      %54 = arith.subf %34, %53 : vector<8x128xf32>
      %55 = math.exp %54 : vector<8x128xf32>
      %56 = arith.subf %47, %53 : vector<8x128xf32>
      %57 = math.exp %56 : vector<8x128xf32>
      %58 = arith.addf %55, %57 : vector<8x128xf32>
      %59 = arith.subf %51, %53 : vector<8x128xf32>
      %60 = math.exp %59 : vector<8x128xf32>
      %61 = arith.addf %58, %60 : vector<8x128xf32>
      %62 = math.log %61 : vector<8x128xf32>
      %63 = arith.addf %53, %62 : vector<8x128xf32>
      %c0_30 = arith.constant 0 : index
      %c0_31 = arith.constant 0 : index
      %64 = vector.load %arg8[%c0_30, %c0_31] : memref<8x128xf32, #tpu.memory_space<vmem>>, vector<8x128xf32>
      tpu.vector_store %arg8[%c0_30, %c0_31], %63 {strides = array<i32>} : memref<8x128xf32, #tpu.memory_space<vmem>>, vector<8x128xf32>,
    } else {
    }
    return
  }
  func.func @transform_0(%arg0: i32, %arg1: i32) -> (i32, i32) {
    %c0_i32 = arith.constant 0 : i32
    return %arg0, %arg1 : i32, i32
  }
  func.func @transform_1(%arg0: i32, %arg1: i32) -> (i32, i32) {
    %c0_i32 = arith.constant 0 : i32
    %c0_i32_0 = arith.constant 0 : i32
    return %arg0, %c0_i32 : i32, i32
  }
  func.func @transform_2(%arg0: i32, %arg1: i32) -> (i32, i32) {
    %c0_i32 = arith.constant 0 : i32
    %c0_i32_0 = arith.constant 0 : i32
    return %arg1, %c0_i32 : i32, i32
  }
  func.func @transform_3(%arg0: i32, %arg1: i32) -> (i32, i32) {
    %c0_i32 = arith.constant 0 : i32
    %c0_i32_0 = arith.constant 0 : i32
    %c0_i32_1 = arith.constant 0 : i32
    return %c0_i32, %c0_i32_0 : i32, i32
  }
  func.func @transform_4(%arg0: i32, %arg1: i32) -> (i32, i32) {
    %c0_i32 = arith.constant 0 : i32
    %c0_i32_0 = arith.constant 0 : i32
    %c0_i32_1 = arith.constant 0 : i32
    return %c0_i32, %c0_i32_0 : i32, i32
  }
  func.func @transform_5(%arg0: i32, %arg1: i32) -> (i32, i32) {
    %c0_i32 = arith.constant 0 : i32
    %c0_i32_0 = arith.constant 0 : i32
    %c0_i32_1 = arith.constant 0 : i32
    return %c0_i32, %c0_i32_0 : i32, i32
  }
  func.func @transform_6(%arg0: i32, %arg1: i32) -> (i32, i32) {
    %c0_i32 = arith.constant 0 : i32
    %c0_i32_0 = arith.constant 0 : i32
    return %arg0, %c0_i32 : i32, i32
  }
}

</mosaic_0001>

<llo_original>
// kernel: tpu_custom_call.1
$region0: #{tpu_custom_call.1}
  #allocation0 [shape = 'u32[]', space=smem, size = 0x4, offset = 0x4, fixed_abs, tag = 'smem constant byte address 0x4 - core index']
  #allocation1 [shape = 'u32[144,128]{1,0:T(1,128)}', space=vmem, size = 0x12000, scoped, tag = 'internal scratch']
  #allocation2 [shape = 'f32[8,128]{1,0:T(8,128)}', space=vmem, size = 0x1000, scoped, tag = 'scratch operand']
  %s0 = inlined_call_operand.hbm [shape: f32[8,128], index: 0, kind: input, shape index: {}]
  %s1 = inlined_call_operand.hbm [shape: f32[8,128], index: 1, kind: input, shape index: {}]
  %s2 = inlined_call_operand.hbm [shape: f32[128,128], index: 2, kind: input, shape index: {}]
  %s3 = inlined_call_operand.vmem [shape: f32[1,128], index: 3, kind: input, shape index: {}]
  %s4 = inlined_call_operand.hbm [shape: f32[128,256], index: 4, kind: input, shape index: {}]
  %s5 = inlined_call_operand.vmem [shape: f32[1,256], index: 5, kind: input, shape index: {}]
  %s6 = inlined_call_operand.hbm [shape: f32[8,128], index: 6, kind: output, shape index: {}]
  %s7 = sld [smem:[#allocation0]]
  $region58: #{tpu_custom_call.1} parent=0
    _
  %s9 = ssub.s32 1, %s7
  %s10 = scalar_select 0, %s9, %s7
  $region1: #{tpu_custom_call.1} parent=0
    #allocation3 [shape = 'u8[4096]{0}', space=vmem, size = 0x1000, scoped, tag = 'input window, operand 0, single buffered']
    #allocation4 [shape = 's32[1]{0}', space=sflag, size = 0x4, scoped, tag = 'scoped memory for tpu_custom_call.1']
    #allocation5 [shape = 's32[1]{0}', space=sflag, size = 0x4, scoped, tag = 'scoped memory for tpu_custom_call.1']
    #allocation6 [shape = 'u8[4096]{0}', space=vmem, size = 0x1000, scoped, tag = 'input window, operand 1, single buffered']
    #allocation7 [shape = 's32[1]{0}', space=sflag, size = 0x4, scoped, tag = 'scoped memory for tpu_custom_call.1']
    #allocation8 [shape = 'u8[65536]{0}', space=vmem, size = 0x10000, scoped, tag = 'input window, operand 2, single buffered']
    #allocation9 [shape = 'u8[131072]{0}', space=vmem, size = 0x20000, scoped, tag = 'input window, operand 4, single buffered']
    #allocation10 [shape = 's32[1]{0}', space=sflag, size = 0x4, scoped, tag = 'scoped memory for tpu_custom_call.1']
    #allocation11 [shape = 'u8[4096]{0}', space=vmem, size = 0x1000, scoped, tag = 'output window, operand 0, single buffered']
    %11 = vsyncpa [#allocation4], 0
    %12 = vsyncpa [#allocation7], 0
    %13 = vsyncpa [#allocation10], 0
    %14 = vsyncpa [#allocation5], 0
    // Predicated region
    $region2: #{tpu_custom_call.1} parent=1 // pred_check
      _
    $region3: #{tpu_custom_call.1} parent=1 // pred_check_branch
      %16 = sbr.rel (0) target = $region5
    $region4: #{tpu_custom_call.1} parent=1 // pred_region
      %s18 = ssub.s32 128, 128
      %19 = vsyncadd [#allocation4], %s18
      %s21 = sshll.u32 [#allocation3], 4
      %s22 = int_to_ptr.vmem [resolvable:$true] %s21
      %24 = dma.hbm_to_vmem [thread:$0]  %s0, 128, %s22, [#allocation4]
    $region5: #{tpu_custom_call.1} parent=1 // pred_fallthru
      _
    // Predicated region
    $region6: #{tpu_custom_call.1} parent=1 // pred_check
      _
    $region7: #{tpu_custom_call.1} parent=1 // pred_check_branch
      %26 = sbr.rel (0) target = $region9
    $region8: #{tpu_custom_call.1} parent=1 // pred_region
      %s28 = ssub.s32 128, 128
      %29 = vsyncadd [#allocation7], %s28
      %s31 = sshll.u32 [#allocation6], 4
      %s32 = int_to_ptr.vmem [resolvable:$true] %s31
      %34 = dma.hbm_to_vmem [thread:$0]  %s1, 128, %s32, [#allocation7]
    $region9: #{tpu_custom_call.1} parent=1 // pred_fallthru
      _
    // Predicated region
    $region10: #{tpu_custom_call.1} parent=1 // pred_check
      _
    $region11: #{tpu_custom_call.1} parent=1 // pred_check_branch
      %36 = sbr.rel (0) target = $region13
    $region12: #{tpu_custom_call.1} parent=1 // pred_region
      %s38 = ssub.s32 2048, 2048
      %39 = vsyncadd [#allocation7], %s38
      %s40 = sshll.u32 [#allocation8], 4
      %s41 = int_to_ptr.vmem [resolvable:$true] %s40
      %46 = dma.hbm_to_vmem [thread:$0]  %s2, 2048, %s41, [#allocation7], 128, 128, 8
    $region13: #{tpu_custom_call.1} parent=1 // pred_fallthru
      _
    // Predicated region
    $region14: #{tpu_custom_call.1} parent=1 // pred_check
      _
    $region15: #{tpu_custom_call.1} parent=1 // pred_check_branch
      %48 = sbr.rel (0) target = $region17
    $region16: #{tpu_custom_call.1} parent=1 // pred_region
      _
    $region17: #{tpu_custom_call.1} parent=1 // pred_fallthru
      _
    // Predicated region
    $region18: #{tpu_custom_call.1} parent=1 // pred_check
      _
    $region19: #{tpu_custom_call.1} parent=1 // pred_check_branch
      %50 = sbr.rel (0) target = $region21
    $region20: #{tpu_custom_call.1} parent=1 // pred_region
      %s52 = ssub.s32 4096, 4096
      %53 = vsyncadd [#allocation10], %s52
      %s54 = sshll.u32 [#allocation9], 4
      %s55 = int_to_ptr.vmem [resolvable:$true] %s54
      %60 = dma.hbm_to_vmem [thread:$0]  %s4, 4096, %s55, [#allocation10], 256, 256, 16
    $region21: #{tpu_custom_call.1} parent=1 // pred_fallthru
      _
    // Predicated region
    $region22: #{tpu_custom_call.1} parent=1 // pred_check
      _
    $region23: #{tpu_custom_call.1} parent=1 // pred_check_branch
      %62 = sbr.rel (0) target = $region25
    $region24: #{tpu_custom_call.1} parent=1 // pred_region
      _
    $region25: #{tpu_custom_call.1} parent=1 // pred_fallthru
      _
    // Predicated region
    $region26: #{tpu_custom_call.1} parent=1 // pred_check
      _
    $region27: #{tpu_custom_call.1} parent=1 // pred_check_branch
      %64 = sbr.rel (0) target = $region29
    $region28: #{tpu_custom_call.1} parent=1 // pred_region
      %65 = dma.done [#allocation4], 128
    $region29: #{tpu_custom_call.1} parent=1 // pred_fallthru
      _
    // Predicated region
    $region30: #{tpu_custom_call.1} parent=1 // pred_check
      _
    $region31: #{tpu_custom_call.1} parent=1 // pred_check_branch
      %67 = sbr.rel (0) target = $region33
    $region32: #{tpu_custom_call.1} parent=1 // pred_region
      %68 = dma.done [#allocation7], 128
    $region33: #{tpu_custom_call.1} parent=1 // pred_fallthru
      _
    // Predicated region
    $region34: #{tpu_custom_call.1} parent=1 // pred_check
      _
    $region35: #{tpu_custom_call.1} parent=1 // pred_check_branch
      %70 = sbr.rel (0) target = $region37
    $region36: #{tpu_custom_call.1} parent=1 // pred_region
      %71 = dma.done [#allocation7], 2048
    $region37: #{tpu_custom_call.1} parent=1 // pred_fallthru
      _
    // Predicated region
    $region38: #{tpu_custom_call.1} parent=1 // pred_check
      _
    $region39: #{tpu_custom_call.1} parent=1 // pred_check_branch
      %73 = sbr.rel (0) target = $region41
    $region40: #{tpu_custom_call.1} parent=1 // pred_region
      %74 = dma.done [#allocation10], 4096
    $region41: #{tpu_custom_call.1} parent=1 // pred_fallthru
      _
    %p75 = scmp.eq.s32.totalorder 0, 0
    // Predicated region
    $region42: #{tpu_custom_call.1} parent=1 // pred_check
      %p76 = pneg %p75
    $region43: #{tpu_custom_call.1} parent=1 // pred_check_branch
      %78 = sbr.rel (%p76) target = $region45
    $region44: #{tpu_custom_call.1} parent=1 // pred_region
      %79 = vst [vmem:[#allocation2] sm:$0xff] 0.0
    $region45: #{tpu_custom_call.1} parent=1 // pred_fallthru
      _
    %v80 = vld [vmem:[#allocation2] sm:$0xff]
    %v81 = vld [vmem:[#allocation3] sm:$0xff]
    %v82 = vld [vmem:[#allocation8] sm:$0xff]
    %v83 = vld [vmem:[#allocation8 + $0x8] sm:$0xff]
    %v84 = vld [vmem:[#allocation8 + $0x10] sm:$0xff]
    %v85 = vld [vmem:[#allocation8 + $0x18] sm:$0xff]
    %v86 = vld [vmem:[#allocation8 + $0x20] sm:$0xff]
    %v87 = vld [vmem:[#allocation8 + $0x28] sm:$0xff]
    %v88 = vld [vmem:[#allocation8 + $0x30] sm:$0xff]
    %v89 = vld [vmem:[#allocation8 + $0x38] sm:$0xff]
    %v90 = vld [vmem:[#allocation8 + $0x40] sm:$0xff]
    %v91 = vld [vmem:[#allocation8 + $0x48] sm:$0xff]
    %v92 = vld [vmem:[#allocation8 + $0x50] sm:$0xff]
    %v93 = vld [vmem:[#allocation8 + $0x58] sm:$0xff]
    %v94 = vld [vmem:[#allocation8 + $0x60] sm:$0xff]
    %v95 = vld [vmem:[#allocation8 + $0x68] sm:$0xff]
    %v96 = vld [vmem:[#allocation8 + $0x70] sm:$0xff]
    %v97 = vld [vmem:[#allocation8 + $0x78] sm:$0xff]
    %98 = vmatprep.subr.mxu0 0.0
    %99 = vmatpush1.msra.mxu0 %v82
    %100 = vmatprep.subr.mxu0 0.0
    %101 = vmatpush1.msra.mxu0 %v83
    %102 = vmatprep.subr.mxu0 0.0
    %103 = vmatpush1.msra.mxu0 %v84
    %104 = vmatprep.subr.mxu0 0.0
    %105 = vmatpush1.msra.mxu0 %v85
    %106 = vmatprep.subr.mxu0 0.0
    %107 = vmatpush1.msra.mxu0 %v86
    %108 = vmatprep.subr.mxu0 0.0
    %109 = vmatpush1.msra.mxu0 %v87
    %110 = vmatprep.subr.mxu0 0.0
    %111 = vmatpush1.msra.mxu0 %v88
    %112 = vmatprep.subr.mxu0 0.0
    %113 = vmatpush1.msra.mxu0 %v89
    %114 = vmatprep.subr.mxu0 0.0
    %115 = vmatpush1.msra.mxu0 %v90
    %116 = vmatprep.subr.mxu0 0.0
    %117 = vmatpush1.msra.mxu0 %v91
    %118 = vmatprep.subr.mxu0 0.0
    %119 = vmatpush1.msra.mxu0 %v92
    %120 = vmatprep.subr.mxu0 0.0
    %121 = vmatpush1.msra.mxu0 %v93
    %122 = vmatprep.subr.mxu0 0.0
    %123 = vmatpush1.msra.mxu0 %v94
    %124 = vmatprep.subr.mxu0 0.0
    %125 = vmatpush1.msra.mxu0 %v95
    %126 = vmatprep.subr.mxu0 0.0
    %127 = vmatpush1.msra.mxu0 %v96
    %128 = vmatprep.subr.mxu0 0.0
    %129 = vmatpush1.msra.mxu0 %v97
    %130 = vmatprep.subr.mxu0 0.0
    %131 = vmatpush1.msra.mxu0 0.0
    %132 = vmatprep.subr.mxu0 0.0
    %133 = vmatpush1.msra.mxu0 0.0
    %134 = vmatprep.subr.mxu0 0.0
    %135 = vmatpush1.msra.mxu0 0.0
    %136 = vmatprep.subr.mxu0 0.0
    %137 = vmatpush1.msra.mxu0 0.0
    %138 = vmatprep.subr.mxu0 0.0
    %139 = vmatpush1.msra.mxu0 0.0
    %140 = vmatprep.subr.mxu0 0.0
    %141 = vmatpush1.msra.mxu0 0.0
    %142 = vmatprep.subr.mxu0 0.0
    %143 = vmatpush1.msra.mxu0 0.0
    %144 = vmatprep.subr.mxu0 0.0
    %145 = vmatpush1.msra.mxu0 0.0
    %146 = vmatprep.subr.mxu0 0.0
    %147 = vmatpush1.msra.mxu0 0.0
    %148 = vmatprep.subr.mxu0 0.0
    %149 = vmatpush1.msra.mxu0 0.0
    %150 = vmatprep.subr.mxu0 0.0
    %151 = vmatpush1.msra.mxu0 0.0
    %152 = vmatprep.subr.mxu0 0.0
    %153 = vmatpush1.msra.mxu0 0.0
    %154 = vmatprep.subr.mxu0 0.0
    %155 = vmatpush1.msra.mxu0 0.0
    %156 = vmatprep.subr.mxu0 0.0
    %157 = vmatpush1.msra.mxu0 0.0
    %158 = vmatprep.subr.mxu0 0.0
    %159 = vmatpush1.msra.mxu0 0.0
    %160 = vmatprep.subr.mxu0 0.0
    %161 = vmatpush1.msra.mxu0 0.0
    %162 = vmatprep.mubr.f32.mxu0 0.0
    %163 = vmatmul.mubr.f32.gmra.mrb[0].mxu0 %v81
    %v164 = vpop.f32.mrb[0].mxu0
    %v165 = vadd.f32 0.0, %v164
    %v166 = vpop.f32.mrb[0].mxu0
    %167 = vdwg.mxu0
    %v168 = vadd.f32 %v80, %v165
    %169 = vst [vmem:[#allocation2] sm:$0xff] %v168
    // Predicated region
    $region46: #{tpu_custom_call.1} parent=1 // pred_check
      %p170 = pneg %p75
    $region47: #{tpu_custom_call.1} parent=1 // pred_check_branch
      %172 = sbr.rel (%p170) target = $region49
    $region48: #{tpu_custom_call.1} parent=1 // pred_region
      %v173 = vld [vmem:[#allocation2] sm:$0xff]
      %v174 = vld [vmem:[%s3] sm:$0x1]
      %v176 = vlaneseq
      %v177 = vshrl.u32 %v176, 7
      %v178 = vsub.s32 0, %v177
      %v179 = vrot.slane %v174, %v178
      %v181 = vadd.f32 %v173, %v179
      %v182 = vxor.u32 %v181, 2147483648
      %v183 = vmul.f32 %v182, 1.442695
      %v184 = vpow.pop %v183
      %v185 = vadd.f32 %v184, 1.0
      %v186 = vrcp.pop %v185
      %v187 = vmul.f32 1.0, %v186
      %v188 = vmul.f32 %v181, %v187
      %v189 = vld [vmem:[#allocation9] sm:$0xff]
      %v190 = vld [vmem:[#allocation9 + $0x8] sm:$0xff]
      %v191 = vld [vmem:[#allocation9 + $0x10] sm:$0xff]
      %v192 = vld [vmem:[#allocation9 + $0x18] sm:$0xff]
      %v193 = vld [vmem:[#allocation9 + $0x20] sm:$0xff]
      %v194 = vld [vmem:[#allocation9 + $0x28] sm:$0xff]
      %v195 = vld [vmem:[#allocation9 + $0x30] sm:$0xff]
      %v196 = vld [vmem:[#allocation9 + $0x38] sm:$0xff]
      %v197 = vld [vmem:[#allocation9 + $0x40] sm:$0xff]
      %v198 = vld [vmem:[#allocation9 + $0x48] sm:$0xff]
      %v199 = vld [vmem:[#allocation9 + $0x50] sm:$0xff]
      %v200 = vld [vmem:[#allocation9 + $0x58] sm:$0xff]
      %v201 = vld [vmem:[#allocation9 + $0x60] sm:$0xff]
      %v202 = vld [vmem:[#allocation9 + $0x68] sm:$0xff]
      %v203 = vld [vmem:[#allocation9 + $0x70] sm:$0xff]
      %v204 = vld [vmem:[#allocation9 + $0x78] sm:$0xff]
      %v205 = vld [vmem:[#allocation9 + $0x80] sm:$0xff]
      %v206 = vld [vmem:[#allocation9 + $0x88] sm:$0xff]
      %v207 = vld [vmem:[#allocation9 + $0x90] sm:$0xff]
      %v208 = vld [vmem:[#allocation9 + $0x98] sm:$0xff]
      %v209 = vld [vmem:[#allocation9 + $0xa0] sm:$0xff]
      %v210 = vld [vmem:[#allocation9 + $0xa8] sm:$0xff]
      %v211 = vld [vmem:[#allocation9 + $0xb0] sm:$0xff]
      %v212 = vld [vmem:[#allocation9 + $0xb8] sm:$0xff]
      %v213 = vld [vmem:[#allocation9 + $0xc0] sm:$0xff]
      %v214 = vld [vmem:[#allocation9 + $0xc8] sm:$0xff]
      %v215 = vld [vmem:[#allocation9 + $0xd0] sm:$0xff]
      %v216 = vld [vmem:[#allocation9 + $0xd8] sm:$0xff]
      %v217 = vld [vmem:[#allocation9 + $0xe0] sm:$0xff]
      %v218 = vld [vmem:[#allocation9 + $0xe8] sm:$0xff]
      %v219 = vld [vmem:[#allocation9 + $0xf0] sm:$0xff]
      %v220 = vld [vmem:[#allocation9 + $0xf8] sm:$0xff]
      %v221 = vld [vmem:[%s5] sm:$0x3]
      %v223 = vlaneseq
      %v224 = vshrl.u32 %v223, 7
      %v225 = vsub.s32 0, %v224
      %v226 = vrot.slane %v221, %v225
      %v227 = vlaneseq
      %v228 = vshrl.u32 %v227, 7
      %v229 = vsub.s32 1, %v228
      %v230 = vrot.slane %v221, %v229
      %233 = vmatprep.subr.mxu0 %v190
      %234 = vmatpush1.msra.mxu0 %v189
      %235 = vmatprep.subr.mxu0 %v192
      %236 = vmatpush1.msra.mxu0 %v191
      %237 = vmatprep.subr.mxu0 %v194
      %238 = vmatpush1.msra.mxu0 %v193
      %239 = vmatprep.subr.mxu0 %v196
      %240 = vmatpush1.msra.mxu0 %v195
      %241 = vmatprep.subr.mxu0 %v198
      %242 = vmatpush1.msra.mxu0 %v197
      %243 = vmatprep.subr.mxu0 %v200
      %244 = vmatpush1.msra.mxu0 %v199
      %245 = vmatprep.subr.mxu0 %v202
      %246 = vmatpush1.msra.mxu0 %v201
      %247 = vmatprep.subr.mxu0 %v204
      %248 = vmatpush1.msra.mxu0 %v203
      %249 = vmatprep.subr.mxu0 %v206
      %250 = vmatpush1.msra.mxu0 %v205
      %251 = vmatprep.subr.mxu0 %v208
      %252 = vmatpush1.msra.mxu0 %v207
      %253 = vmatprep.subr.mxu0 %v210
      %254 = vmatpush1.msra.mxu0 %v209
      %255 = vmatprep.subr.mxu0 %v212
      %256 = vmatpush1.msra.mxu0 %v211
      %257 = vmatprep.subr.mxu0 %v214
      %258 = vmatpush1.msra.mxu0 %v213
      %259 = vmatprep.subr.mxu0 %v216
      %260 = vmatpush1.msra.mxu0 %v215
      %261 = vmatprep.subr.mxu0 %v218
      %262 = vmatpush1.msra.mxu0 %v217
      %263 = vmatprep.subr.mxu0 %v220
      %264 = vmatpush1.msra.mxu0 %v219
      %265 = vmatprep.subr.mxu0 0.0
      %266 = vmatpush1.msra.mxu0 0.0
      %267 = vmatprep.subr.mxu0 0.0
      %268 = vmatpush1.msra.mxu0 0.0
      %269 = vmatprep.subr.mxu0 0.0
      %270 = vmatpush1.msra.mxu0 0.0
      %271 = vmatprep.subr.mxu0 0.0
      %272 = vmatpush1.msra.mxu0 0.0
      %273 = vmatprep.subr.mxu0 0.0
      %274 = vmatpush1.msra.mxu0 0.0
      %275 = vmatprep.subr.mxu0 0.0
      %276 = vmatpush1.msra.mxu0 0.0
      %277 = vmatprep.subr.mxu0 0.0
      %278 = vmatpush1.msra.mxu0 0.0
      %279 = vmatprep.subr.mxu0 0.0
      %280 = vmatpush1.msra.mxu0 0.0
      %281 = vmatprep.subr.mxu0 0.0
      %282 = vmatpush1.msra.mxu0 0.0
      %283 = vmatprep.subr.mxu0 0.0
      %284 = vmatpush1.msra.mxu0 0.0
      %285 = vmatprep.subr.mxu0 0.0
      %286 = vmatpush1.msra.mxu0 0.0
      %287 = vmatprep.subr.mxu0 0.0
      %288 = vmatpush1.msra.mxu0 0.0
      %289 = vmatprep.subr.mxu0 0.0
      %290 = vmatpush1.msra.mxu0 0.0
      %291 = vmatprep.subr.mxu0 0.0
      %292 = vmatpush1.msra.mxu0 0.0
      %293 = vmatprep.subr.mxu0 0.0
      %294 = vmatpush1.msra.mxu0 0.0
      %295 = vmatprep.subr.mxu0 0.0
      %296 = vmatpush1.msra.mxu0 0.0
      %297 = vmatprep.mubr.f32.mxu0 0.0
      %298 = vmatmul.mubr.f32.gmra.mrb[0].mxu0 %v188
      %v299 = vpop.f32.mrb[0].mxu0
      %v300 = vadd.f32 %v226, %v299
      %v301 = vpop.f32.mrb[0].mxu0
      %v302 = vadd.f32 %v230, %v301
      %303 = vdwg.mxu0
      %v304 = vld [vmem:[#allocation6] sm:$0xff]
      %v305 = vmul.f32 %v304, %v304
      %v306 = vmul.f32 %v305, 0.5
      %v307 = vsub.f32 -2.8160586, %v306
      %v308 = vsub.f32 %v304, %v300
      %v309 = vadd.f32 %v302, 1.837877
      %v310 = vmul.f32 %v308, %v308
      %v311 = vsub.f32 0.0, %v302
      %v312 = vmul.f32 %v311, 1.442695
      %v313 = vpow.pop %v312
      %v314 = vmul.f32 %v310, %v313
      %v315 = vadd.f32 %v309, %v314
      %v316 = vmul.f32 %v315, -0.5
      %v317 = vadd.f32 %v316, -0.2876821
      %v318 = vmul.f32 %v305, 2.2699965e-05
      %v319 = vsub.f32 -8.221523, %v318
      %v320 = vmax.f32 %v307, %v317
      %v321 = vmax.f32 %v320, %v319
      %v322 = vsub.f32 %v307, %v321
      %v323 = vmul.f32 %v322, 1.442695
      %v324 = vpow.pop %v323
      %v325 = vsub.f32 %v317, %v321
      %v326 = vmul.f32 %v325, 1.442695
      %v327 = vpow.pop %v326
      %v328 = vadd.f32 %v324, %v327
      %v329 = vsub.f32 %v319, %v321
      %v330 = vmul.f32 %v329, 1.442695
      %v331 = vpow.pop %v330
      %v332 = vadd.f32 %v328, %v331
      %v333 = vlog2.pop %v332
      %v334 = vmul.f32 %v333, 0.6931472
      %v335 = vadd.f32 %v321, %v334
      %336 = vst [vmem:[#allocation11] sm:$0xff] %v335
    $region49: #{tpu_custom_call.1} parent=1 // pred_fallthru
      _
    // Predicated region
    $region50: #{tpu_custom_call.1} parent=1 // pred_check
      _
    $region51: #{tpu_custom_call.1} parent=1 // pred_check_branch
      %338 = sbr.rel (0) target = $region53
    $region52: #{tpu_custom_call.1} parent=1 // pred_region
      %s340 = ssub.s32 128, 128
      %341 = vsyncadd [#allocation5], %s340
      %s343 = sshll.u32 [#allocation11], 4
      %s344 = int_to_ptr.vmem [resolvable:$true] %s343
      %346 = dma.vmem_to_hbm [thread:$0]  %s344, 128, %s6, [#allocation5]
    $region53: #{tpu_custom_call.1} parent=1 // pred_fallthru
      _
    // Predicated region
    $region54: #{tpu_custom_call.1} parent=1 // pred_check
      _
    $region55: #{tpu_custom_call.1} parent=1 // pred_check_branch
      %348 = sbr.rel (0) target = $region57
    $region56: #{tpu_custom_call.1} parent=1 // pred_region
      %349 = dma.done [#allocation5], 128
    $region57: #{tpu_custom_call.1} parent=1 // pred_fallthru
      _
    %350 = vsyncpa [#allocation4], 1
    %351 = vsyncpa [#allocation7], 1
    %352 = vsyncpa [#allocation10], 1
    %353 = vsyncpa [#allocation5], 1

</llo_original>
